<compile_context>
chip_gen: v7x
topology: tpu7x:2x2x1
jax: 0.10.0
libtpu: 0.0.40
codegen_flags: <defaults>
</compile_context>

<pallas_src>
import jax
import jax.numpy as jnp
from jax import lax
from jax.experimental import pallas as pl
from jax.experimental.pallas import tpu as pltpu

VOCAB = 10  # nn.Embedding(10, hidden_dim)


def lstm_encoder_kernel(lens_sref,                  # SMEM scalar prefetch: [Bp] int32
                        xg_ref,                     # [T, BT, 4H]  precomputed input gates (time-major)
                        lcol_ref,                   # [BT, 1]      per-row lengths (VMEM)
                        whh_ref,                    # [H, 4H]      W_hh^T, gate order (i, f, o, g)
                        sent_ref,                   # [1, 1, H]    sentinel
                        out_ref):                   # [T+1, BT, H] time-major output block
    tile = pl.program_id(0)
    BT = out_ref.shape[1]
    H = out_ref.shape[2]

    # Rows t >= lens[b] (and padded batch rows) must be zero.
    out_ref[...] = jnp.zeros_like(out_ref)

    whh = whh_ref[...]                              # [H, 4H]
    lens_col = lcol_ref[...]                        # [BT, 1] int32

    # Bound the recurrence by the longest sequence in this batch tile.
    base = tile * BT
    l_max = lens_sref[base]
    for r in range(1, BT):
        l_max = jnp.maximum(l_max, lens_sref[base + r])

    def step(t, carry):
        h, c = carry                                # each [BT, H] f32
        # Input-gate contribution is pre-gathered; one recurrent MXU matmul per step.
        gates = xg_ref[t] + jnp.dot(h, whh, preferred_element_type=jnp.float32)  # [BT, 4H]
        sig = jax.nn.sigmoid(gates[:, :3 * H])      # contiguous (i|f|o) EUP slab
        i_g = sig[:, 0:H]
        f_g = sig[:, H:2 * H]
        o_g = sig[:, 2 * H:3 * H]
        g_g = jnp.tanh(gates[:, 3 * H:])
        c_new = f_g * c + i_g * g_g
        h_new = o_g * jnp.tanh(c_new)
        # Only rows with t < lens[b] emit output; the rest stay zero.
        out_ref[t] = jnp.where(t < lens_col, h_new, 0.0)
        return (h_new, c_new)

    h0 = jnp.zeros((BT, H), jnp.float32)
    c0 = jnp.zeros((BT, H), jnp.float32)
    lax.fori_loop(0, l_max, step, (h0, c0))

    # scatter_: e[b, lens[b], :] = sentinel
    sent = sent_ref[...]                            # [1, 1, H]
    for r in range(BT):
        out_ref[pl.ds(lens_sref[base + r], 1), pl.ds(r, 1), :] = sent


def init_params(key, hidden_dim):
    """Deterministic synthetic parameters (shapes match the PyTorch module)."""
    H = hidden_dim
    k = jax.random.split(key, 6)
    emb = jax.random.normal(k[0], (VOCAB, H), jnp.float32) * 0.1           # nn.Embedding(10, H)
    w_ih = jax.random.normal(k[1], (4 * H, H), jnp.float32) / jnp.sqrt(H)  # LSTM weight_ih_l0 (i,f,g,o)
    w_hh = jax.random.normal(k[2], (4 * H, H), jnp.float32) / jnp.sqrt(H)  # LSTM weight_hh_l0 (i,f,g,o)
    b_ih = jax.random.normal(k[3], (4 * H,), jnp.float32) * 0.1
    b_hh = jax.random.normal(k[4], (4 * H,), jnp.float32) * 0.1
    sentinel = jax.random.uniform(k[5], (H,), jnp.float32)                 # nn.Parameter(torch.rand(H))

    def restack(w):
        # PyTorch gate order (i, f, g, o) -> kernel order (i, f, o, g) so that
        # sigmoid applies to one contiguous [., 3H] slice and tanh to one [., H].
        i, f, g, o = jnp.split(w, 4, axis=0)
        return jnp.concatenate([i, f, o, g], axis=0)

    w_ih = restack(w_ih)
    w_hh = restack(w_hh)
    bias = restack(b_ih + b_hh)
    return {
        "emb": emb,                     # [VOCAB, H]
        "w_ih_t": w_ih.T,               # [H, 4H], gates (i, f, o, g)
        "w_hh_t": w_hh.T,               # [H, 4H]
        "bias": bias[None, :],          # [1, 4H]
        "sentinel": sentinel,           # [H]
    }


def encoder_forward(seq, mask, params, *, block_b=8):
    """Jittable forward. Returns the full [B, T+1, H] buffer; the PyTorch module
    returns out[:, :max(lens)+1, :] (slice downstream to avoid a host sync here)."""
    B, T = seq.shape
    H = params["sentinel"].shape[0]
    lens = jnp.sum(mask, axis=1).astype(jnp.int32)              # [B]

    # Fold embedding lookup + input matmul + bias into a tiny [VOCAB, 4H] table
    # (VOCAB == 10) and gather it per token, time-major for dense per-step loads.
    table = jnp.dot(params["emb"], params["w_ih_t"]) + params["bias"]   # [VOCAB, 4H]
    x_gates = jnp.transpose(table[seq], (1, 0, 2))              # [T, B, 4H]

    # Pad batch to a multiple of block_b so every grid step works on a full
    # 8-sublane batch tile (padded rows have len 0 and are sliced off below).
    BT = block_b
    Bp = ((B + BT - 1) // BT) * BT
    pad = Bp - B
    x_gates = jnp.pad(x_gates, ((0, 0), (0, pad), (0, 0)))
    lens_p = jnp.pad(lens, (0, pad))
    lens_col = lens_p[:, None]                                  # [Bp, 1]

    out_tm = pl.pallas_call(
        lstm_encoder_kernel,
        out_shape=jax.ShapeDtypeStruct((T + 1, Bp, H), jnp.float32),
        grid_spec=pltpu.PrefetchScalarGridSpec(
            num_scalar_prefetch=1,                               # lens -> SMEM
            grid=(Bp // BT,),
            in_specs=[
                pl.BlockSpec((T, BT, 4 * H), lambda i, lens: (0, i, 0)),   # x_gates (time-major)
                pl.BlockSpec((BT, 1), lambda i, lens: (i, 0)),             # per-row lengths
                pl.BlockSpec((H, 4 * H), lambda i, lens: (0, 0)),          # W_hh^T (grid-invariant)
                pl.BlockSpec((1, 1, H), lambda i, lens: (0, 0, 0)),        # sentinel
            ],
            out_specs=pl.BlockSpec((T + 1, BT, H), lambda i, lens: (0, i, 0)),
        ),
        compiler_params=pltpu.CompilerParams(
            dimension_semantics=("parallel",)),                  # batch tiles are independent
    )(lens_p, x_gates, lens_col, params["w_hh_t"], params["sentinel"].reshape(1, 1, H))

    # Time-major [T+1, Bp, H] -> batch-major [B, T+1, H].
    return jnp.transpose(out_tm, (1, 0, 2))[:B]


def reference_forward(seq, mask, params):
    """Pure-JAX reference with identical semantics (full [B, T+1, H] buffer)."""
    B, T = seq.shape
    H = params["sentinel"].shape[0]
    lens = jnp.sum(mask, axis=1).astype(jnp.int32)
    x = params["emb"][seq]                                      # [B, T, H]
    wih, whh, bias = params["w_ih_t"], params["w_hh_t"], params["bias"]

    def cell(carry, x_t):
        h, c = carry
        gates = x_t @ wih + h @ whh + bias                      # gate order (i, f, o, g)
        i = jax.nn.sigmoid(gates[:, 0:H])
        f = jax.nn.sigmoid(gates[:, H:2 * H])
        o = jax.nn.sigmoid(gates[:, 2 * H:3 * H])
        g = jnp.tanh(gates[:, 3 * H:4 * H])
        c = f * c + i * g
        h = o * jnp.tanh(c)
        return (h, c), h

    (_, _), hs = lax.scan(cell,
                          (jnp.zeros((B, H), jnp.float32), jnp.zeros((B, H), jnp.float32)),
                          jnp.swapaxes(x, 0, 1))
    e = jnp.swapaxes(hs, 0, 1)                                  # [B, T, H]
    t_idx = jnp.arange(T)[None, :, None]
    e = jnp.where(t_idx < lens[:, None, None], e, 0.0)
    e = jnp.concatenate([e, jnp.zeros((B, 1, H), jnp.float32)], axis=1)
    pos = jnp.arange(T + 1)[None, :, None]
    e = jnp.where(pos == lens[:, None, None], params["sentinel"][None, None, :], e)
    return e


if __name__ == "__main__":
    B, T, H = 2, 8, 32
    key = jax.random.PRNGKey(0)
    kp, ks = jax.random.split(key)

    params = init_params(kp, H)
    seq = jax.random.randint(ks, (B, T), 0, VOCAB, dtype=jnp.int32)
    lengths = jnp.array([T, 5], dtype=jnp.int32)
    mask = (jnp.arange(T)[None, :] < lengths[:, None]).astype(jnp.int32)

    fwd = jax.jit(encoder_forward)
    out = jax.block_until_ready(fwd(seq, mask, params))

    ref = reference_forward(seq, mask, params)
    assert out.shape == ref.shape, (out.shape, ref.shape)
    err = float(jnp.max(jnp.abs(out - ref)))
    assert err < 1e-4, err

    print("KERNEL_OK")
</pallas_src>

<mosaic_0001>
module attributes {stable_mosaic.version = 11 : i64} {
  func.func @lstm_encoder_kernel(%arg0: i32, %arg1: memref<8xi32, #tpu.memory_space<smem>>, %arg2: memref<8x8x128xf32, #tpu.memory_space<vmem>>, %arg3: memref<8x1xi32, #tpu.memory_space<vmem>>, %arg4: memref<32x128xf32, #tpu.memory_space<vmem>>, %arg5: memref<1x1x32xf32, #tpu.memory_space<vmem>>, %arg6: memref<9x8x32xf32, #tpu.memory_space<vmem>>) attributes {dimension_semantics = [#tpu.dimension_semantics<parallel>], iteration_bounds = array<i64: 1>, scalar_prefetch = 1 : i64, scratch_operands = 0 : i64, tpu.core_type = #tpu.core_type<tc>, window_params = [{transform_indices = @transform_0, window_bounds = array<i64: 8, 8, 128>}, {transform_indices = @transform_1, window_bounds = array<i64: 8, 1>}, {pipeline_mode = #tpu.pipeline_mode<synchronous>, transform_indices = @transform_2, window_bounds = array<i64: 32, 128>}, {pipeline_mode = #tpu.pipeline_mode<synchronous>, transform_indices = @transform_3, window_bounds = array<i64: 1, 1, 32>}, {transform_indices = @transform_4, window_bounds = array<i64: 9, 8, 32>}]} {
    %cst = arith.constant 0.000000e+00 : f32
    %0 = vector.broadcast %cst : f32 to vector<9x8x32xf32>
    %c0 = arith.constant 0 : index
    %c0_0 = arith.constant 0 : index
    %c0_1 = arith.constant 0 : index
    %1 = vector.load %arg6[%c0, %c0_0, %c0_1] : memref<9x8x32xf32, #tpu.memory_space<vmem>>, vector<9x8x32xf32>
    tpu.vector_store %arg6[%c0, %c0_0, %c0_1], %0 {strides = array<i32>} : memref<9x8x32xf32, #tpu.memory_space<vmem>>, vector<9x8x32xf32>,
    %c0_2 = arith.constant 0 : index
    %c0_3 = arith.constant 0 : index
    %2 = vector.load %arg4[%c0_2, %c0_3] : memref<32x128xf32, #tpu.memory_space<vmem>>, vector<32x128xf32>
    %c0_4 = arith.constant 0 : index
    %c0_5 = arith.constant 0 : index
    %3 = vector.load %arg3[%c0_4, %c0_5] : memref<8x1xi32, #tpu.memory_space<vmem>>, vector<8x1xi32>
    %c8_i32 = arith.constant 8 : i32
    %4 = arith.muli %arg0, %c8_i32 : i32
    %5 = arith.index_cast %4 : i32 to index
    %6 = memref.load %arg1[%5] : memref<8xi32, #tpu.memory_space<smem>>
    %c1_i32 = arith.constant 1 : i32
    %7 = arith.addi %4, %c1_i32 : i32
    %8 = arith.index_cast %7 : i32 to index
    %9 = memref.load %arg1[%8] : memref<8xi32, #tpu.memory_space<smem>>
    %10 = arith.maxsi %6, %9 : i32
    %c2_i32 = arith.constant 2 : i32
    %11 = arith.addi %4, %c2_i32 : i32
    %12 = arith.index_cast %11 : i32 to index
    %13 = memref.load %arg1[%12] : memref<8xi32, #tpu.memory_space<smem>>
    %14 = arith.maxsi %10, %13 : i32
    %c3_i32 = arith.constant 3 : i32
    %15 = arith.addi %4, %c3_i32 : i32
    %16 = arith.index_cast %15 : i32 to index
    %17 = memref.load %arg1[%16] : memref<8xi32, #tpu.memory_space<smem>>
    %18 = arith.maxsi %14, %17 : i32
    %c4_i32 = arith.constant 4 : i32
    %19 = arith.addi %4, %c4_i32 : i32
    %20 = arith.index_cast %19 : i32 to index
    %21 = memref.load %arg1[%20] : memref<8xi32, #tpu.memory_space<smem>>
    %22 = arith.maxsi %18, %21 : i32
    %c5_i32 = arith.constant 5 : i32
    %23 = arith.addi %4, %c5_i32 : i32
    %24 = arith.index_cast %23 : i32 to index
    %25 = memref.load %arg1[%24] : memref<8xi32, #tpu.memory_space<smem>>
    %26 = arith.maxsi %22, %25 : i32
    %c6_i32 = arith.constant 6 : i32
    %27 = arith.addi %4, %c6_i32 : i32
    %28 = arith.index_cast %27 : i32 to index
    %29 = memref.load %arg1[%28] : memref<8xi32, #tpu.memory_space<smem>>
    %30 = arith.maxsi %26, %29 : i32
    %c7_i32 = arith.constant 7 : i32
    %31 = arith.addi %4, %c7_i32 : i32
    %32 = arith.index_cast %31 : i32 to index
    %33 = memref.load %arg1[%32] : memref<8xi32, #tpu.memory_space<smem>>
    %34 = arith.maxsi %30, %33 : i32
    %cst_6 = arith.constant 0.000000e+00 : f32
    %35 = vector.broadcast %cst_6 : f32 to vector<8x32xf32>
    %cst_7 = arith.constant 0.000000e+00 : f32
    %36 = vector.broadcast %cst_7 : f32 to vector<8x32xf32>
    %c0_i32 = arith.constant 0 : i32
    %37 = arith.subi %34, %c0_i32 : i32
    %38 = arith.addi %c0_i32, %37 : i32
    %c1_i32_8 = arith.constant 1 : i32
    %39:2 = scf.for %arg7 = %c0_i32 to %38 step %c1_i32_8 iter_args(%arg8 = %35, %arg9 = %36) -> (vector<8x32xf32>, vector<8x32xf32>)  : i32 {
      %81 = arith.index_cast %arg7 : i32 to index
      %c0_29 = arith.constant 0 : index
      %c0_30 = arith.constant 0 : index
      %82 = vector.load %arg2[%81, %c0_29, %c0_30] : memref<8x8x128xf32, #tpu.memory_space<vmem>>, vector<1x8x128xf32>
      %83 = vector.shape_cast %82 : vector<1x8x128xf32> to vector<8x128xf32>
      %cst_31 = arith.constant dense<0.000000e+00> : vector<8x128xf32>
      %84 = tpu.matmul %arg8, %2, %cst_31 {dimension_numbers = #tpu.dot_dimension_numbers<[1], [0], [0], [1], [0, 0, 1, 1], [], []>} : vector<8x32xf32>, vector<32x128xf32>, vector<8x128xf32> -> vector<8x128xf32>
      %85 = arith.addf %83, %84 : vector<8x128xf32>
      %86 = vector.extract_strided_slice %85 {offsets = [0, 0], sizes = [8, 96], strides = [1, 1]} : vector<8x128xf32> to vector<8x96xf32>
      %87 = arith.negf %86 : vector<8x96xf32>
      %88 = math.exp %87 : vector<8x96xf32>
      %cst_32 = arith.constant 1.000000e+00 : f32
      %89 = vector.broadcast %cst_32 : f32 to vector<8x96xf32>
      %90 = arith.addf %89, %88 : vector<8x96xf32>
      %91 = arith.divf %89, %90 : vector<8x96xf32>
      %92 = vector.extract_strided_slice %91 {offsets = [0, 0], sizes = [8, 32], strides = [1, 1]} : vector<8x96xf32> to vector<8x32xf32>
      %93 = vector.extract_strided_slice %91 {offsets = [0, 32], sizes = [8, 32], strides = [1, 1]} : vector<8x96xf32> to vector<8x32xf32>
      %94 = vector.extract_strided_slice %91 {offsets = [0, 64], sizes = [8, 32], strides = [1, 1]} : vector<8x96xf32> to vector<8x32xf32>
      %95 = vector.extract_strided_slice %85 {offsets = [0, 96], sizes = [8, 32], strides = [1, 1]} : vector<8x128xf32> to vector<8x32xf32>
      %96 = math.tanh %95 : vector<8x32xf32>
      %97 = arith.mulf %93, %arg9 : vector<8x32xf32>
      %98 = arith.mulf %92, %96 : vector<8x32xf32>
      %99 = arith.addf %97, %98 : vector<8x32xf32>
      %100 = math.tanh %99 : vector<8x32xf32>
      %101 = arith.mulf %94, %100 : vector<8x32xf32>
      %102 = vector.broadcast %arg7 : i32 to vector<8x1xi32>
      %103 = arith.cmpi slt, %102, %3 : vector<8x1xi32>
      %cst_33 = arith.constant 0.000000e+00 : f32
      %104 = vector.shape_cast %103 : vector<8x1xi1> to vector<8x1xi1>
      %105 = vector.broadcast %104 : vector<8x1xi1> to vector<8x32xi1>
      %106 = vector.broadcast %cst_33 : f32 to vector<8x32xf32>
      %107 = arith.select %105, %101, %106 : vector<8x32xi1>, vector<8x32xf32>
      %108 = arith.index_cast %arg7 : i32 to index
      %c0_34 = arith.constant 0 : index
      %c0_35 = arith.constant 0 : index
      %109 = vector.load %arg6[%108, %c0_34, %c0_35] : memref<9x8x32xf32, #tpu.memory_space<vmem>>, vector<1x8x32xf32>
      %110 = vector.shape_cast %109 : vector<1x8x32xf32> to vector<8x32xf32>
      %111 = vector.shape_cast %107 : vector<8x32xf32> to vector<1x8x32xf32>
      tpu.vector_store %arg6[%108, %c0_34, %c0_35], %111 {strides = array<i32>} : memref<9x8x32xf32, #tpu.memory_space<vmem>>, vector<1x8x32xf32>,
      scf.yield %101, %99 : vector<8x32xf32>, vector<8x32xf32>
    }
    %c0_9 = arith.constant 0 : index
    %c0_10 = arith.constant 0 : index
    %c0_11 = arith.constant 0 : index
    %40 = vector.load %arg5[%c0_9, %c0_10, %c0_11] : memref<1x1x32xf32, #tpu.memory_space<vmem>>, vector<1x1x32xf32>
    %c0_i32_12 = arith.constant 0 : i32
    %41 = arith.addi %4, %c0_i32_12 : i32
    %42 = arith.index_cast %41 : i32 to index
    %43 = memref.load %arg1[%42] : memref<8xi32, #tpu.memory_space<smem>>
    %44 = arith.index_cast %43 : i32 to index
    %c0_13 = arith.constant 0 : index
    %c0_14 = arith.constant 0 : index
    %45 = vector.load %arg6[%44, %c0_13, %c0_14] : memref<9x8x32xf32, #tpu.memory_space<vmem>>, vector<1x1x32xf32>
    tpu.vector_store %arg6[%44, %c0_13, %c0_14], %40 {strides = array<i32>} : memref<9x8x32xf32, #tpu.memory_space<vmem>>, vector<1x1x32xf32>,
    %c1_i32_15 = arith.constant 1 : i32
    %46 = arith.addi %4, %c1_i32_15 : i32
    %47 = arith.index_cast %46 : i32 to index
    %48 = memref.load %arg1[%47] : memref<8xi32, #tpu.memory_space<smem>>
    %49 = arith.index_cast %48 : i32 to index
    %c1 = arith.constant 1 : index
    %c0_16 = arith.constant 0 : index
    %50 = vector.load %arg6[%49, %c1, %c0_16] : memref<9x8x32xf32, #tpu.memory_space<vmem>>, vector<1x1x32xf32>
    tpu.vector_store %arg6[%49, %c1, %c0_16], %40 {strides = array<i32>} : memref<9x8x32xf32, #tpu.memory_space<vmem>>, vector<1x1x32xf32>,
    %c2_i32_17 = arith.constant 2 : i32
    %51 = arith.addi %4, %c2_i32_17 : i32
    %52 = arith.index_cast %51 : i32 to index
    %53 = memref.load %arg1[%52] : memref<8xi32, #tpu.memory_space<smem>>
    %54 = arith.index_cast %53 : i32 to index
    %c2 = arith.constant 2 : index
    %c0_18 = arith.constant 0 : index
    %55 = vector.load %arg6[%54, %c2, %c0_18] : memref<9x8x32xf32, #tpu.memory_space<vmem>>, vector<1x1x32xf32>
    tpu.vector_store %arg6[%54, %c2, %c0_18], %40 {strides = array<i32>} : memref<9x8x32xf32, #tpu.memory_space<vmem>>, vector<1x1x32xf32>,
    %c3_i32_19 = arith.constant 3 : i32
    %56 = arith.addi %4, %c3_i32_19 : i32
    %57 = arith.index_cast %56 : i32 to index
    %58 = memref.load %arg1[%57] : memref<8xi32, #tpu.memory_space<smem>>
    %59 = arith.index_cast %58 : i32 to index
    %c3 = arith.constant 3 : index
    %c0_20 = arith.constant 0 : index
    %60 = vector.load %arg6[%59, %c3, %c0_20] : memref<9x8x32xf32, #tpu.memory_space<vmem>>, vector<1x1x32xf32>
    tpu.vector_store %arg6[%59, %c3, %c0_20], %40 {strides = array<i32>} : memref<9x8x32xf32, #tpu.memory_space<vmem>>, vector<1x1x32xf32>,
    %c4_i32_21 = arith.constant 4 : i32
    %61 = arith.addi %4, %c4_i32_21 : i32
    %62 = arith.index_cast %61 : i32 to index
    %63 = memref.load %arg1[%62] : memref<8xi32, #tpu.memory_space<smem>>
    %64 = arith.index_cast %63 : i32 to index
    %c4 = arith.constant 4 : index
    %c0_22 = arith.constant 0 : index
    %65 = vector.load %arg6[%64, %c4, %c0_22] : memref<9x8x32xf32, #tpu.memory_space<vmem>>, vector<1x1x32xf32>
    tpu.vector_store %arg6[%64, %c4, %c0_22], %40 {strides = array<i32>} : memref<9x8x32xf32, #tpu.memory_space<vmem>>, vector<1x1x32xf32>,
    %c5_i32_23 = arith.constant 5 : i32
    %66 = arith.addi %4, %c5_i32_23 : i32
    %67 = arith.index_cast %66 : i32 to index
    %68 = memref.load %arg1[%67] : memref<8xi32, #tpu.memory_space<smem>>
    %69 = arith.index_cast %68 : i32 to index
    %c5 = arith.constant 5 : index
    %c0_24 = arith.constant 0 : index
    %70 = vector.load %arg6[%69, %c5, %c0_24] : memref<9x8x32xf32, #tpu.memory_space<vmem>>, vector<1x1x32xf32>
    tpu.vector_store %arg6[%69, %c5, %c0_24], %40 {strides = array<i32>} : memref<9x8x32xf32, #tpu.memory_space<vmem>>, vector<1x1x32xf32>,
    %c6_i32_25 = arith.constant 6 : i32
    %71 = arith.addi %4, %c6_i32_25 : i32
    %72 = arith.index_cast %71 : i32 to index
    %73 = memref.load %arg1[%72] : memref<8xi32, #tpu.memory_space<smem>>
    %74 = arith.index_cast %73 : i32 to index
    %c6 = arith.constant 6 : index
    %c0_26 = arith.constant 0 : index
    %75 = vector.load %arg6[%74, %c6, %c0_26] : memref<9x8x32xf32, #tpu.memory_space<vmem>>, vector<1x1x32xf32>
    tpu.vector_store %arg6[%74, %c6, %c0_26], %40 {strides = array<i32>} : memref<9x8x32xf32, #tpu.memory_space<vmem>>, vector<1x1x32xf32>,
    %c7_i32_27 = arith.constant 7 : i32
    %76 = arith.addi %4, %c7_i32_27 : i32
    %77 = arith.index_cast %76 : i32 to index
    %78 = memref.load %arg1[%77] : memref<8xi32, #tpu.memory_space<smem>>
    %79 = arith.index_cast %78 : i32 to index
    %c7 = arith.constant 7 : index
    %c0_28 = arith.constant 0 : index
    %80 = vector.load %arg6[%79, %c7, %c0_28] : memref<9x8x32xf32, #tpu.memory_space<vmem>>, vector<1x1x32xf32>
    tpu.vector_store %arg6[%79, %c7, %c0_28], %40 {strides = array<i32>} : memref<9x8x32xf32, #tpu.memory_space<vmem>>, vector<1x1x32xf32>,
    return
  }
  func.func @transform_0(%arg0: i32, %arg1: memref<8xi32, #tpu.memory_space<smem>>) -> (i32, i32, i32) {
    %c0_i32 = arith.constant 0 : i32
    %c0_i32_0 = arith.constant 0 : i32
    %c0_i32_1 = arith.constant 0 : i32
    return %c0_i32, %arg0, %c0_i32_0 : i32, i32, i32
  }
  func.func @transform_1(%arg0: i32, %arg1: memref<8xi32, #tpu.memory_space<smem>>) -> (i32, i32) {
    %c0_i32 = arith.constant 0 : i32
    %c0_i32_0 = arith.constant 0 : i32
    return %arg0, %c0_i32 : i32, i32
  }
  func.func @transform_2(%arg0: i32, %arg1: memref<8xi32, #tpu.memory_space<smem>>) -> (i32, i32) {
    %c0_i32 = arith.constant 0 : i32
    %c0_i32_0 = arith.constant 0 : i32
    %c0_i32_1 = arith.constant 0 : i32
    return %c0_i32, %c0_i32_0 : i32, i32
  }
  func.func @transform_3(%arg0: i32, %arg1: memref<8xi32, #tpu.memory_space<smem>>) -> (i32, i32, i32) {
    %c0_i32 = arith.constant 0 : i32
    %c0_i32_0 = arith.constant 0 : i32
    %c0_i32_1 = arith.constant 0 : i32
    %c0_i32_2 = arith.constant 0 : i32
    return %c0_i32, %c0_i32_0, %c0_i32_1 : i32, i32, i32
  }
  func.func @transform_4(%arg0: i32, %arg1: memref<8xi32, #tpu.memory_space<smem>>) -> (i32, i32, i32) {
    %c0_i32 = arith.constant 0 : i32
    %c0_i32_0 = arith.constant 0 : i32
    %c0_i32_1 = arith.constant 0 : i32
    return %c0_i32, %arg0, %c0_i32_0 : i32, i32, i32
  }
}

</mosaic_0001>

<llo_original>
// kernel: encoder_forward.1
$region0: #{encoder_forward.1}
  #allocation0 [shape = 'u32[]', space=smem, size = 0x4, offset = 0x4, fixed_abs, tag = 'smem constant byte address 0x4 - core index']
  #allocation1 [shape = 'u32[144,128]{1,0:T(1,128)}', space=vmem, size = 0x12000, scoped, tag = 'internal scratch']
  #allocation2 [shape = 's32[1]{0}', space=sflag, size = 0x4, scoped, tag = 'scoped memory for encoder_forward.1']
  #allocation3 [shape = 'u8[512]{0}', space=smem, size = 0x200, scoped, tag = 'prefetched SMEM operand 0']
  %s0 = inlined_call_operand.vmem [shape: s32[8], index: 0, kind: input, shape index: {}]
  %s1 = inlined_call_operand.vmem [shape: f32[8,8,128], index: 1, kind: input, shape index: {}]
  %s2 = inlined_call_operand.vmem [shape: s32[8,1], index: 2, kind: input, shape index: {}]
  %s3 = inlined_call_operand.vmem [shape: f32[32,128], index: 3, kind: input, shape index: {}]
  %s4 = inlined_call_operand.vmem [shape: f32[1,1,32], index: 4, kind: input, shape index: {}]
  %s5 = inlined_call_operand.vmem [shape: f32[9,8,32], index: 5, kind: output, shape index: {}]
  %s6 = sld [smem:[#allocation0]]
  $region33: #{encoder_forward.1} parent=0
    _
  %s8 = ssub.s32 1, %s6
  %s9 = scalar_select 0, %s8, %s6
  %s10 = sshll.u32 %s0, 4
  %s11 = int_to_ptr.vmem [resolvable:$true] %s10
  %13 = dma.vmem_to_smem %s11, 16, [#allocation3], [#allocation2]
  %14 = dma.done [#allocation2], 16
  %15 = sfence
  // Predicated region
  $region2: #{encoder_forward.1} parent=0 // pred_check
    _
  $region3: #{encoder_forward.1} parent=0 // pred_check_branch
    %17 = sbr.rel (0) target = $region5
  $region4: #{encoder_forward.1} parent=0 // pred_region
    _
  $region5: #{encoder_forward.1} parent=0 // pred_fallthru
    _
  // Predicated region
  $region6: #{encoder_forward.1} parent=0 // pred_check
    _
  $region7: #{encoder_forward.1} parent=0 // pred_check_branch
    %19 = sbr.rel (0) target = $region9
  $region8: #{encoder_forward.1} parent=0 // pred_region
    _
  $region9: #{encoder_forward.1} parent=0 // pred_fallthru
    _
  // Predicated region
  $region10: #{encoder_forward.1} parent=0 // pred_check
    _
  $region11: #{encoder_forward.1} parent=0 // pred_check_branch
    %21 = sbr.rel (0) target = $region13
  $region12: #{encoder_forward.1} parent=0 // pred_region
    _
  $region13: #{encoder_forward.1} parent=0 // pred_fallthru
    _
  // Predicated region
  $region14: #{encoder_forward.1} parent=0 // pred_check
    _
  $region15: #{encoder_forward.1} parent=0 // pred_check_branch
    %23 = sbr.rel (0) target = $region17
  $region16: #{encoder_forward.1} parent=0 // pred_region
    _
  $region17: #{encoder_forward.1} parent=0 // pred_fallthru
    _
  %vm24 = vcmask 261120
  %25 = vst.msk [vmem:[%s5] sm:$0xff] %vm24, 0.0
  %26 = vst.msk [vmem:[%s5 + $0x8] sm:$0xff] %vm24, 0.0
  %27 = vst.msk [vmem:[%s5 + $0x10] sm:$0xff] %vm24, 0.0
  %28 = vst.msk [vmem:[%s5 + $0x18] sm:$0xff] %vm24, 0.0
  %29 = vst.msk [vmem:[%s5 + $0x20] sm:$0xff] %vm24, 0.0
  %30 = vst.msk [vmem:[%s5 + $0x28] sm:$0xff] %vm24, 0.0
  %31 = vst.msk [vmem:[%s5 + $0x30] sm:$0xff] %vm24, 0.0
  %32 = vst.msk [vmem:[%s5 + $0x38] sm:$0xff] %vm24, 0.0
  %33 = vst.msk [vmem:[%s5 + $0x40] sm:$0xff] %vm24, 0.0
  %v34 = vld [vmem:[%s3] sm:$0xff]
  %v35 = vld [vmem:[%s3 + $0x8] sm:$0xff]
  %v36 = vld [vmem:[%s3 + $0x10] sm:$0xff]
  %v37 = vld [vmem:[%s3 + $0x18] sm:$0xff]
  %v38 = vld [vmem:[%s2] sm:$0xff]
  %s39 = smul.u32 0, 8
  %s40 = sld [smem:[#allocation3 + %s39]]
  %s41 = sadd.s32 %s39, 1
  %s42 = sld [smem:[#allocation3 + %s41]]
  %p43 = scmp.gt.s32.totalorder %s40, %s42
  %s44 = scalar_select %p43, %s40, %s42
  %s45 = sadd.s32 %s39, 2
  %s46 = sld [smem:[#allocation3 + %s45]]
  %p47 = scmp.gt.s32.totalorder %s44, %s46
  %s48 = scalar_select %p47, %s44, %s46
  %s49 = sadd.s32 %s39, 3
  %s50 = sld [smem:[#allocation3 + %s49]]
  %p51 = scmp.gt.s32.totalorder %s48, %s50
  %s52 = scalar_select %p51, %s48, %s50
  %s53 = sadd.s32 %s39, 4
  %s54 = sld [smem:[#allocation3 + %s53]]
  %p55 = scmp.gt.s32.totalorder %s52, %s54
  %s56 = scalar_select %p55, %s52, %s54
  %s57 = sadd.s32 %s39, 5
  %s58 = sld [smem:[#allocation3 + %s57]]
  %p59 = scmp.gt.s32.totalorder %s56, %s58
  %s60 = scalar_select %p59, %s56, %s58
  %s61 = sadd.s32 %s39, 6
  %s62 = sld [smem:[#allocation3 + %s61]]
  %p63 = scmp.gt.s32.totalorder %s60, %s62
  %s64 = scalar_select %p63, %s60, %s62
  %s65 = sadd.s32 %s39, 7
  %s66 = sld [smem:[#allocation3 + %s65]]
  %p67 = scmp.gt.s32.totalorder %s64, %s66
  %s68 = scalar_select %p67, %s64, %s66
  // While loop
  $region18: #{encoder_forward.1} parent=0 // loop_pre_header
    _
  $region19: #{encoder_forward.1} parent=0 // loop_header
    %s70 = sphi 0, %s72
    %p71 = scmp.ge.s32.totalorder %s70, %s68
    %v75 = vphi 0.0, %v179
    %v76 = vphi 0.0, %v173
  $region20: #{encoder_forward.1} parent=0 // loop_header_branch
    %74 = sbr.rel (%p71) target = $region24
  $region21: #{encoder_forward.1} parent=0 // loop_body
    %s77 = smul.u32 %s70, 8
    %s78 = scalar_lea.vmem %s1, %s77
    %v79 = vld [vmem:[%s78] sm:$0xff]
    %81 = vrot.lane.b32.xlu0 %v75, 64
    %v82 = vpop.permute.xlu0 %81
    %v83 = vsel %vm24, %v82, 0
    %85 = vmatprep.subr.mxu0 0.0
    %86 = vmatpush1.msra.mxu0 %v34
    %87 = vmatprep.subr.mxu0 0.0
    %88 = vmatpush1.msra.mxu0 %v35
    %89 = vmatprep.subr.mxu0 0.0
    %90 = vmatpush1.msra.mxu0 %v36
    %91 = vmatprep.subr.mxu0 0.0
    %92 = vmatpush1.msra.mxu0 %v37
    %93 = vmatprep.subr.mxu0 0.0
    %94 = vmatpush1.msra.mxu0 0.0
    %95 = vmatprep.subr.mxu0 0.0
    %96 = vmatpush1.msra.mxu0 0.0
    %97 = vmatprep.subr.mxu0 0.0
    %98 = vmatpush1.msra.mxu0 0.0
    %99 = vmatprep.subr.mxu0 0.0
    %100 = vmatpush1.msra.mxu0 0.0
    %101 = vmatprep.subr.mxu0 0.0
    %102 = vmatpush1.msra.mxu0 0.0
    %103 = vmatprep.subr.mxu0 0.0
    %104 = vmatpush1.msra.mxu0 0.0
    %105 = vmatprep.subr.mxu0 0.0
    %106 = vmatpush1.msra.mxu0 0.0
    %107 = vmatprep.subr.mxu0 0.0
    %108 = vmatpush1.msra.mxu0 0.0
    %109 = vmatprep.subr.mxu0 0.0
    %110 = vmatpush1.msra.mxu0 0.0
    %111 = vmatprep.subr.mxu0 0.0
    %112 = vmatpush1.msra.mxu0 0.0
    %113 = vmatprep.subr.mxu0 0.0
    %114 = vmatpush1.msra.mxu0 0.0
    %115 = vmatprep.subr.mxu0 0.0
    %116 = vmatpush1.msra.mxu0 0.0
    %117 = vmatprep.subr.mxu0 0.0
    %118 = vmatpush1.msra.mxu0 0.0
    %119 = vmatprep.subr.mxu0 0.0
    %120 = vmatpush1.msra.mxu0 0.0
    %121 = vmatprep.subr.mxu0 0.0
    %122 = vmatpush1.msra.mxu0 0.0
    %123 = vmatprep.subr.mxu0 0.0
    %124 = vmatpush1.msra.mxu0 0.0
    %125 = vmatprep.subr.mxu0 0.0
    %126 = vmatpush1.msra.mxu0 0.0
    %127 = vmatprep.subr.mxu0 0.0
    %128 = vmatpush1.msra.mxu0 0.0
    %129 = vmatprep.subr.mxu0 0.0
    %130 = vmatpush1.msra.mxu0 0.0
    %131 = vmatprep.subr.mxu0 0.0
    %132 = vmatpush1.msra.mxu0 0.0
    %133 = vmatprep.subr.mxu0 0.0
    %134 = vmatpush1.msra.mxu0 0.0
    %135 = vmatprep.subr.mxu0 0.0
    %136 = vmatpush1.msra.mxu0 0.0
    %137 = vmatprep.subr.mxu0 0.0
    %138 = vmatpush1.msra.mxu0 0.0
    %139 = vmatprep.subr.mxu0 0.0
    %140 = vmatpush1.msra.mxu0 0.0
    %141 = vmatprep.subr.mxu0 0.0
    %142 = vmatpush1.msra.mxu0 0.0
    %143 = vmatprep.subr.mxu0 0.0
    %144 = vmatpush1.msra.mxu0 0.0
    %145 = vmatprep.subr.mxu0 0.0
    %146 = vmatpush1.msra.mxu0 0.0
    %147 = vmatprep.subr.mxu0 0.0
    %148 = vmatpush1.msra.mxu0 0.0
    %149 = vmatprep.mubr.f32.mxu0 0.0
    %150 = vmatmul.mubr.f32.gmra.mrb[0].mxu0 %v83
    %v151 = vpop.f32.mrb[0].mxu0
    %v152 = vadd.f32 0.0, %v151
    %v153 = vpop.f32.mrb[0].mxu0
    %154 = vdwg.mxu0
    %v155 = vadd.f32 %v79, %v152
    %v156 = vxor.u32 %v155, 2147483648
    %v157 = vmul.f32 %v156, 1.442695
    %v158 = vpow.pop %v157
    %v159 = vadd.f32 %v158, 1.0
    %v160 = vrcp.pop %v159
    %v161 = vmul.f32 1.0, %v160
    %v162 = vtanh.pop %v155
    %v163 = vmul.f32 %v161, %v76
    %165 = vrot.lane.b32.xlu0 %v162, 32
    %v166 = vpop.permute.xlu0 %165
    %v168 = vmul.f32 %v161, %v166
    %170 = vrot.lane.b32.xlu0 %v168, 32
    %v171 = vpop.permute.xlu0 %170
    %v173 = vadd.f32 %v163, %v171
    %v174 = vtanh.pop %v173
    %176 = vrot.lane.b32.xlu0 %v174, 32
    %v177 = vpop.permute.xlu0 %176
    %v179 = vmul.f32 %v161, %v177
    %v180 = vstv %s70
    %vm181 = vcmp.lt.s32.totalorder %v180, %v38
    %v182 = vsel %vm181, 1, 0
    %183 = vset.pattern.permute.xlu0 0
    %184 = vperm.xlu0 %183, %v182
    %v185 = vpop.permute.xlu0 %184
    %vm186 = vcmp.eq.s32.totalorder %v185, 1
    %v187 = vsel %vm186, %v179, 0.0
    %189 = vrot.lane.b32.xlu0 %v187, 64
    %v190 = vpop.permute.xlu0 %189
    %s192 = scalar_lea.vmem %s5, %s77
    %193 = vst.msk [vmem:[%s192] sm:$0xff] %vm24, %v190
  $region22: #{encoder_forward.1} parent=0 // loop_footer
    %s72 = sadd.s32 %s70, 1
  $region23: #{encoder_forward.1} parent=0 // loop_footer_branch
    %69 = sbr.rel target = $region19
  $region24: #{encoder_forward.1} parent=0 // loop_exit
    _
  %v194 = vld [vmem:[%s4] sm:$0x1]
  %s195 = sld [smem:[#allocation3 + %s39]]
  %s196 = smul.u32 %s195, 8
  %s197 = scalar_lea.vmem %s5, %s196
  %vm198 = vcmask 253952
  %199 = vst.msk [vmem:[%s197] sm:$0x1] %vm198, %v194
  %s200 = sld [smem:[#allocation3 + %s41]]
  %s201 = smul.u32 %s200, 8
  %s202 = scalar_lea.vmem %s5, %s201
  %203 = vst.msk [vmem:[%s202 + $0x1] sm:$0x1] %vm198, %v194
  %s204 = sld [smem:[#allocation3 + %s45]]
  %s205 = smul.u32 %s204, 8
  %s206 = scalar_lea.vmem %s5, %s205
  %207 = vst.msk [vmem:[%s206 + $0x2] sm:$0x1] %vm198, %v194
  %s208 = sld [smem:[#allocation3 + %s49]]
  %s209 = smul.u32 %s208, 8
  %s210 = scalar_lea.vmem %s5, %s209
  %211 = vst.msk [vmem:[%s210 + $0x3] sm:$0x1] %vm198, %v194
  %s212 = sld [smem:[#allocation3 + %s53]]
  %s213 = smul.u32 %s212, 8
  %s214 = scalar_lea.vmem %s5, %s213
  %215 = vst.msk [vmem:[%s214 + $0x4] sm:$0x1] %vm198, %v194
  %s216 = sld [smem:[#allocation3 + %s57]]
  %s217 = smul.u32 %s216, 8
  %s218 = scalar_lea.vmem %s5, %s217
  %219 = vst.msk [vmem:[%s218 + $0x5] sm:$0x1] %vm198, %v194
  %s220 = sld [smem:[#allocation3 + %s61]]
  %s221 = smul.u32 %s220, 8
  %s222 = scalar_lea.vmem %s5, %s221
  %223 = vst.msk [vmem:[%s222 + $0x6] sm:$0x1] %vm198, %v194
  %s224 = sld [smem:[#allocation3 + %s65]]
  %s225 = smul.u32 %s224, 8
  %s226 = scalar_lea.vmem %s5, %s225
  %227 = vst.msk [vmem:[%s226 + $0x7] sm:$0x1] %vm198, %v194
  // Predicated region
  $region25: #{encoder_forward.1} parent=0 // pred_check
    _
  $region26: #{encoder_forward.1} parent=0 // pred_check_branch
    %229 = sbr.rel (0) target = $region28
  $region27: #{encoder_forward.1} parent=0 // pred_region
    _
  $region28: #{encoder_forward.1} parent=0 // pred_fallthru
    _
  // Predicated region
  $region29: #{encoder_forward.1} parent=0 // pred_check
    _
  $region30: #{encoder_forward.1} parent=0 // pred_check_branch
    %231 = sbr.rel (0) target = $region32
  $region31: #{encoder_forward.1} parent=0 // pred_region
    _
  $region32: #{encoder_forward.1} parent=0 // pred_fallthru
    _

</llo_original>
